<compile_context>
chip_gen: v5e
topology: v5e:2x2
jax: 0.10.0
libtpu: 0.0.40
codegen_flags: <defaults>
</compile_context>

<pallas_src>
import jax
import jax.numpy as jnp
from jax.experimental import pallas as pl
from jax.experimental.pallas import tpu as pltpu


def _focus_conv_bn_silu_kernel(x_ref, w_ref, bias_ref, o_ref):
    # x_ref:    (1, K, TN)   space-to-depth activations, spatial lane-dense.
    # w_ref:    (C2, K)      1x1 conv weight with BN scale folded in.
    # bias_ref: (C2, 1)      folded BN bias (f32).
    # o_ref:    (1, C2, TN)  output tile, already flattened-NCHW.
    y = jnp.dot(w_ref[...], x_ref[0], preferred_element_type=jnp.float32)  # (C2, TN)
    y = y + bias_ref[...]                      # broadcast (C2,1) over lanes
    # SiLU with a single EUP transcendental: sigmoid(y) = 0.5*(tanh(0.5*y)+1)
    sig = 0.5 * (jnp.tanh(0.5 * y) + 1.0)
    o_ref[0] = (y * sig).astype(o_ref.dtype)


def _ceil_div(a, b):
    return -(-a // b)


def _round_up(a, m):
    return _ceil_div(a, m) * m


def focus_forward(x, w, gamma, beta, running_mean, running_var,
                  eps=1e-5, tn=16384, compute_dtype=None, out_dtype=None):
    """Focus.forward: space-to-depth, Conv(4*c1 -> c2, k=1, bias=False) + BN(eval) + SiLU.

    x: (B, C1, H, W) NCHW.   w: (C2, 4*C1, 1, 1).   Returns (B, C2, H//2, W//2).
    compute_dtype / out_dtype may be jnp.bfloat16 to halve HBM traffic
    (accumulation and the SiLU epilogue stay in f32).
    """
    B, C1, H, W = x.shape
    assert H % 2 == 0 and W % 2 == 0
    H2, W2 = H // 2, W // 2
    S = H2 * W2
    C2 = w.shape[0]
    K = 4 * C1
    if compute_dtype is None:
        compute_dtype = x.dtype
    if out_dtype is None:
        out_dtype = x.dtype

    # --- space-to-depth with ONE copy (reshape is a view; the transpose is the copy).
    # Resulting channel order (2*s + r)*C1 + c matches torch.cat((::2,::2),(1::2,::2),
    # (::2,1::2),(1::2,1::2)).
    xv = x.reshape(B, C1, H2, 2, W2, 2)                           # (B, c, h2, r, w2, s) view
    xm = jnp.transpose(xv, (0, 5, 3, 1, 2, 4)).reshape(B, K, S).astype(compute_dtype)

    # --- fold BatchNorm (eval) into the conv weight and a bias vector.
    inv_std = gamma / jnp.sqrt(running_var + eps)                          # (C2,)
    wm = (w.reshape(C2, K) * inv_std[:, None]).astype(compute_dtype)       # scale folded
    bias = (beta - running_mean * inv_std).reshape(C2, 1).astype(jnp.float32)

    # --- tile selection: large lane-dense tiles, bounded by a VMEM budget that
    # fits every generation (v7x has only 64 MiB VMEM, v5e a 16 MiB default scope).
    in_item = jnp.dtype(compute_dtype).itemsize
    out_item = jnp.dtype(out_dtype).itemsize
    bytes_per_lane = 2 * (K * in_item + C2 * out_item)          # double-buffered in+out
    vmem_tile_budget = 20 * 1024 * 1024
    tn_budget = max(128, (vmem_tile_budget // bytes_per_lane // 128) * 128)
    tn_max = max(128, min(int(tn), int(tn_budget)))

    if S <= tn_max:
        tn_eff = S                                  # single block == full dim (legal)
    else:
        tn_eff = max(128, (tn_max // 128) * 128)
    n_blocks = _ceil_div(S, tn_eff)

    # v7x has 2 TensorCores: make sure there are enough grid steps to feed both
    # (only when the spatial extent is big enough to split into >=128-lane tiles).
    if B * n_blocks < 4 and S > 256:
        want_blocks = _ceil_div(4, B)
        tn_eff = max(128, _round_up(_ceil_div(S, want_blocks), 128))
        n_blocks = _ceil_div(S, tn_eff)

    grid = (B, n_blocks)

    vmem_est = (2 * tn_eff * (K * in_item + C2 * out_item)
                + 2 * C2 * K * in_item + 2 * C2 * 4)
    vmem_limit = int(min(48 * 1024 * 1024, max(32 * 1024 * 1024, 2 * vmem_est)))

    out = pl.pallas_call(
        _focus_conv_bn_silu_kernel,
        out_shape=jax.ShapeDtypeStruct((B, C2, S), out_dtype),
        grid_spec=pltpu.PrefetchScalarGridSpec(
            num_scalar_prefetch=0,
            grid=grid,
            in_specs=[
                pl.BlockSpec((1, K, tn_eff), lambda b, j: (b, 0, j)),
                pl.BlockSpec((C2, K), lambda b, j: (0, 0)),
                pl.BlockSpec((C2, 1), lambda b, j: (0, 0)),
            ],
            out_specs=pl.BlockSpec((1, C2, tn_eff), lambda b, j: (b, 0, j)),
        ),
        compiler_params=pltpu.CompilerParams(
            dimension_semantics=("parallel", "parallel"),
            vmem_limit_bytes=vmem_limit),
    )(xm, wm, bias)

    # Output is already flattened NCHW: reshape is free (no transpose, no slice).
    return out.reshape(B, C2, H2, W2)


def _reference(x, w, gamma, beta, mean, var, eps=1e-5):
    a = x[:, :, ::2, ::2]
    b = x[:, :, 1::2, ::2]
    c = x[:, :, ::2, 1::2]
    d = x[:, :, 1::2, 1::2]
    xc = jnp.concatenate([a, b, c, d], axis=1)
    y = jax.lax.conv_general_dilated(
        xc, w, window_strides=(1, 1), padding="VALID",
        dimension_numbers=("NCHW", "OIHW", "NCHW"))
    s = (gamma / jnp.sqrt(var + eps)).reshape(1, -1, 1, 1)
    t = (beta - mean * gamma / jnp.sqrt(var + eps)).reshape(1, -1, 1, 1)
    y = y * s + t
    return y * jax.nn.sigmoid(y)


def _run_case(key, B, C1, C2, H, W, tn=16384):
    kx, kw, kg, kb = jax.random.split(key, 4)
    x = jax.random.normal(kx, (B, C1, H, W), dtype=jnp.float32)
    w = jax.random.normal(kw, (C2, 4 * C1, 1, 1), dtype=jnp.float32) * 0.1
    gamma = 1.0 + 0.1 * jax.random.normal(kg, (C2,), dtype=jnp.float32)
    beta = 0.1 * jax.random.normal(kb, (C2,), dtype=jnp.float32)
    mean = 0.05 * jnp.arange(C2, dtype=jnp.float32)
    var = 1.0 + 0.1 * jnp.arange(C2, dtype=jnp.float32)

    out = focus_forward(x, w, gamma, beta, mean, var, tn=tn)
    out = jax.block_until_ready(out)
    ref = _reference(x, w, gamma, beta, mean, var)
    assert out.shape == (B, C2, H // 2, W // 2)
    assert jnp.allclose(out, ref, atol=2e-5, rtol=2e-5), (
        f"mismatch: max abs err {jnp.max(jnp.abs(out - ref))}")


if __name__ == "__main__":
    key = jax.random.PRNGKey(0)
    k1, k2, k3 = jax.random.split(key, 3)

    # Small canonical case: Focus(c1=4, c2=8), 2x4x16x16 input, single full-S tile.
    _run_case(k1, B=2, C1=4, C2=8, H=16, W=16)

    # Production-ish shapes: C1=3 (K=12, NOT padded), forced small tile ->
    # 5 spatial blocks with a ragged (masked) last block.
    _run_case(k2, B=2, C1=3, C2=8, H=48, W=48, tn=128)

    # Default tile path: exercises the megacore split (grid forced to >=4 steps)
    # with a ragged last spatial block and no wrapper-side padding/slicing.
    _run_case(k3, B=2, C1=3, C2=16, H=48, W=48)

    print("KERNEL_OK")
</pallas_src>

<mosaic_0001>
module attributes {stable_mosaic.version = 11 : i64} {
  func.func @_focus_conv_bn_silu_kernel(%arg0: i32, %arg1: i32, %arg2: memref<1x16x64xf32, #tpu.memory_space<vmem>>, %arg3: memref<8x16xf32, #tpu.memory_space<vmem>>, %arg4: memref<8x1xf32, #tpu.memory_space<vmem>>, %arg5: memref<1x8x64xf32, #tpu.memory_space<vmem>>) attributes {dimension_semantics = [#tpu.dimension_semantics<parallel>, #tpu.dimension_semantics<parallel>], iteration_bounds = array<i64: 2, 1>, scalar_prefetch = 0 : i64, scratch_operands = 0 : i64, tpu.core_type = #tpu.core_type<tc>, window_params = [{transform_indices = @transform_0, window_bounds = array<i64: 1, 16, 64>}, {pipeline_mode = #tpu.pipeline_mode<synchronous>, transform_indices = @transform_1, window_bounds = array<i64: 8, 16>}, {pipeline_mode = #tpu.pipeline_mode<synchronous>, transform_indices = @transform_2, window_bounds = array<i64: 8, 1>}, {transform_indices = @transform_3, window_bounds = array<i64: 1, 8, 64>}]} {
    %c0 = arith.constant 0 : index
    %c0_0 = arith.constant 0 : index
    %0 = vector.load %arg3[%c0, %c0_0] : memref<8x16xf32, #tpu.memory_space<vmem>>, vector<8x16xf32>
    %c0_1 = arith.constant 0 : index
    %c0_2 = arith.constant 0 : index
    %c0_3 = arith.constant 0 : index
    %1 = vector.load %arg2[%c0_1, %c0_2, %c0_3] : memref<1x16x64xf32, #tpu.memory_space<vmem>>, vector<1x16x64xf32>
    %2 = vector.shape_cast %1 : vector<1x16x64xf32> to vector<16x64xf32>
    %cst = arith.constant dense<0.000000e+00> : vector<8x64xf32>
    %3 = tpu.matmul %0, %2, %cst {dimension_numbers = #tpu.dot_dimension_numbers<[1], [0], [0], [1], [0, 0, 1, 1], [], []>} : vector<8x16xf32>, vector<16x64xf32>, vector<8x64xf32> -> vector<8x64xf32>
    %c0_4 = arith.constant 0 : index
    %c0_5 = arith.constant 0 : index
    %4 = vector.load %arg4[%c0_4, %c0_5] : memref<8x1xf32, #tpu.memory_space<vmem>>, vector<8x1xf32>
    %5 = vector.broadcast %4 : vector<8x1xf32> to vector<8x64xf32>
    %6 = arith.addf %3, %5 : vector<8x64xf32>
    %cst_6 = arith.constant 5.000000e-01 : f32
    %7 = vector.broadcast %cst_6 : f32 to vector<8x64xf32>
    %8 = arith.mulf %7, %6 : vector<8x64xf32>
    %9 = math.tanh %8 : vector<8x64xf32>
    %cst_7 = arith.constant 1.000000e+00 : f32
    %10 = vector.broadcast %cst_7 : f32 to vector<8x64xf32>
    %11 = arith.addf %9, %10 : vector<8x64xf32>
    %cst_8 = arith.constant 5.000000e-01 : f32
    %12 = vector.broadcast %cst_8 : f32 to vector<8x64xf32>
    %13 = arith.mulf %12, %11 : vector<8x64xf32>
    %14 = arith.mulf %6, %13 : vector<8x64xf32>
    %c0_9 = arith.constant 0 : index
    %c0_10 = arith.constant 0 : index
    %c0_11 = arith.constant 0 : index
    %15 = vector.load %arg5[%c0_9, %c0_10, %c0_11] : memref<1x8x64xf32, #tpu.memory_space<vmem>>, vector<1x8x64xf32>
    %16 = vector.shape_cast %15 : vector<1x8x64xf32> to vector<8x64xf32>
    %17 = vector.shape_cast %14 : vector<8x64xf32> to vector<1x8x64xf32>
    tpu.vector_store %arg5[%c0_9, %c0_10, %c0_11], %17 {strides = array<i32>} : memref<1x8x64xf32, #tpu.memory_space<vmem>>, vector<1x8x64xf32>,
    return
  }
  func.func @transform_0(%arg0: i32, %arg1: i32) -> (i32, i32, i32) {
    %c0_i32 = arith.constant 0 : i32
    %c0_i32_0 = arith.constant 0 : i32
    return %arg0, %c0_i32, %arg1 : i32, i32, i32
  }
  func.func @transform_1(%arg0: i32, %arg1: i32) -> (i32, i32) {
    %c0_i32 = arith.constant 0 : i32
    %c0_i32_0 = arith.constant 0 : i32
    %c0_i32_1 = arith.constant 0 : i32
    return %c0_i32, %c0_i32_0 : i32, i32
  }
  func.func @transform_2(%arg0: i32, %arg1: i32) -> (i32, i32) {
    %c0_i32 = arith.constant 0 : i32
    %c0_i32_0 = arith.constant 0 : i32
    %c0_i32_1 = arith.constant 0 : i32
    return %c0_i32, %c0_i32_0 : i32, i32
  }
  func.func @transform_3(%arg0: i32, %arg1: i32) -> (i32, i32, i32) {
    %c0_i32 = arith.constant 0 : i32
    %c0_i32_0 = arith.constant 0 : i32
    return %arg0, %c0_i32, %arg1 : i32, i32, i32
  }
}

</mosaic_0001>

<llo_original>
// kernel: tpu_custom_call.1
$region0: #{tpu_custom_call.1}
  #allocation0 [shape = 'u32[]', space=smem, size = 0x4, offset = 0x4, fixed_abs, tag = 'smem constant byte address 0x4 - core index']
  #allocation1 [shape = 'u32[72,128]{1,0:T(1,128)}', space=vmem, size = 0x9000, scoped, tag = 'internal scratch']
  %s0 = inlined_call_operand.hbm [shape: f32[2,16,64], index: 0, kind: input, shape index: {}]
  %s1 = inlined_call_operand.vmem [shape: f32[8,16], index: 1, kind: input, shape index: {}]
  %s2 = inlined_call_operand.vmem [shape: f32[8,1], index: 2, kind: input, shape index: {}]
  %s3 = inlined_call_operand.hbm [shape: f32[2,8,64], index: 3, kind: output, shape index: {}]
  %s4 = sld [smem:[#allocation0]]
  $region49: #{tpu_custom_call.1} parent=0
    _
  %s6 = ssub.s32 1, %s4
  %s7 = scalar_select 0, %s6, %s4
  $region1: #{tpu_custom_call.1} parent=0
    #allocation2 [shape = 'u8[16384]{0}', space=vmem, size = 0x4000, scoped, tag = 'input window, operand 0']
    #allocation3 [shape = 's32[2]{0}', space=sflag, size = 0x8, scoped, tag = 'scoped memory for tpu_custom_call.1']
    #allocation4 [shape = 's32[2]{0}', space=sflag, size = 0x8, scoped, tag = 'scoped memory for tpu_custom_call.1']
    #allocation5 [shape = 'u8[8192]{0}', space=vmem, size = 0x2000, scoped, tag = 'output window, operand 0']
    %8 = vsyncpa [#allocation3], 0
    %s9 = scalar_lea.sflag [#allocation3], 1
    %10 = vsyncpa %s9, 0
    %11 = vsyncpa [#allocation4], 0
    %s12 = scalar_lea.sflag [#allocation4], 1
    %13 = vsyncpa %s12, 0
    loop: start=0, step=1, limit=4
    $region2: #{tpu_custom_call.1} parent=1 // loop_pre_header
      _
    $region3: #{tpu_custom_call.1} parent=1 // loop_header
      %s15 = sphi 0, %s19
      %p16 = scmp.ge.s32.totalorder %s15, 4
      %s22 = sphi 0, %s34
      %s23 = sphi 0, %s30
      %s24 = sphi 0, %s22
      %s25 = sphi 0, %s23
      %s26 = sphi 0, %s24
      %s27 = sphi 0, %s25
      %s39 = sphi 0, %s41
      %s42 = sphi 0, %s39
      %s43 = sphi 0, %s42
      %s59 = sphi 0, %s43
      %s63 = sphi 0, %s63
      %s65 = sphi 0, %s63
      %s66 = sphi 0, %s65
      %s80 = sphi 0, %s66
      %s84 = sphi 0, %s84
      %s86 = sphi 0, %s84
      %s87 = sphi 0, %s86
      %s101 = sphi 0, %s87
      %s109 = sphi 0, %s111
      %s112 = sphi 0, %s109
      %s113 = sphi 0, %s112
      %s129 = sphi 0, %s113
    $region4: #{tpu_custom_call.1} parent=1 // loop_header_branch
      %18 = sbr.rel (%p16) target = $region8
    $region5: #{tpu_custom_call.1} parent=1 // loop_body
      %s20 = ssub.s32 %s15, 1
      %s21 = ssub.s32 %s15, 2
      %s28 = sadd.s32 1, %s23
      %p29 = scmp.ge.s32.totalorder %s28, 1
      %s30 = scalar_select %p29, 0, %s28
      %s31 = sadd.s32 1, %s22
      %s32 = scalar_select %p29, %s31, %s22
      %p33 = scmp.ge.s32.totalorder %s32, 2
      %s34 = scalar_select %p33, 0, %s32
      %s35 = ssub.s32 %s22, %s34
      %s36 = ssub.s32 %s23, %s30
      %s37 = sor.u32 %s35, %s36
      %p38 = scmp.eq.s32.totalorder %s37, 0
      %s40 = sadd.s32 %s39, 1
      %s41 = scalar_select %p38, %s39, %s40
      %p44 = pneg %p38
      %p45 = scmp.eq.s32.totalorder %s15, 1
      %p46 = por %p44, %p45
      %p47 = scmp.ne.s32.totalorder %s39, %s42
      %p48 = scmp.eq.s32.totalorder %s15, 0
      %p49 = por %p47, %p48
      %p50 = scmp.ne.s32.totalorder %s39, %s42
      %p51 = scmp.eq.s32.totalorder %s20, 1
      %p52 = por %p50, %p51
      %p53 = scmp.ne.s32.totalorder %s42, %s43
      %p54 = scmp.eq.s32.totalorder %s20, 0
      %p55 = por %p53, %p54
      %p56 = scmp.ne.s32.totalorder %s42, %s43
      %p57 = scmp.eq.s32.totalorder %s21, 1
      %p58 = por %p56, %p57
      %p60 = scmp.ne.s32.totalorder %s43, %s59
      %p61 = scmp.eq.s32.totalorder %s21, 0
      %p62 = por %p60, %p61
      %s64 = sadd.s32 %s63, 1
      %p67 = scmp.eq.s32.totalorder %s15, 1
      %p68 = scmp.ne.s32.totalorder %s63, %s65
      %p69 = scmp.eq.s32.totalorder %s15, 0
      %p70 = por %p68, %p69
      %p71 = scmp.ne.s32.totalorder %s63, %s65
      %p72 = scmp.eq.s32.totalorder %s20, 1
      %p73 = por %p71, %p72
      %p74 = scmp.ne.s32.totalorder %s65, %s66
      %p75 = scmp.eq.s32.totalorder %s20, 0
      %p76 = por %p74, %p75
      %p77 = scmp.ne.s32.totalorder %s65, %s66
      %p78 = scmp.eq.s32.totalorder %s21, 1
      %p79 = por %p77, %p78
      %p81 = scmp.ne.s32.totalorder %s66, %s80
      %p82 = scmp.eq.s32.totalorder %s21, 0
      %p83 = por %p81, %p82
      %s85 = sadd.s32 %s84, 1
      %p88 = scmp.eq.s32.totalorder %s15, 1
      %p89 = scmp.ne.s32.totalorder %s84, %s86
      %p90 = scmp.eq.s32.totalorder %s15, 0
      %p91 = por %p89, %p90
      %p92 = scmp.ne.s32.totalorder %s84, %s86
      %p93 = scmp.eq.s32.totalorder %s20, 1
      %p94 = por %p92, %p93
      %p95 = scmp.ne.s32.totalorder %s86, %s87
      %p96 = scmp.eq.s32.totalorder %s20, 0
      %p97 = por %p95, %p96
      %p98 = scmp.ne.s32.totalorder %s86, %s87
      %p99 = scmp.eq.s32.totalorder %s21, 1
      %p100 = por %p98, %p99
      %p102 = scmp.ne.s32.totalorder %s87, %s101
      %p103 = scmp.eq.s32.totalorder %s21, 0
      %p104 = por %p102, %p103
      %s105 = ssub.s32 %s22, %s34
      %s106 = ssub.s32 %s23, %s30
      %s107 = sor.u32 %s105, %s106
      %p108 = scmp.eq.s32.totalorder %s107, 0
      %s110 = sadd.s32 %s109, 1
      %s111 = scalar_select %p108, %s109, %s110
      %p114 = pneg %p108
      %p115 = scmp.eq.s32.totalorder %s15, 1
      %p116 = por %p114, %p115
      %p117 = scmp.ne.s32.totalorder %s109, %s112
      %p118 = scmp.eq.s32.totalorder %s15, 0
      %p119 = por %p117, %p118
      %p120 = scmp.ne.s32.totalorder %s109, %s112
      %p121 = scmp.eq.s32.totalorder %s20, 1
      %p122 = por %p120, %p121
      %p123 = scmp.ne.s32.totalorder %s112, %s113
      %p124 = scmp.eq.s32.totalorder %s20, 0
      %p125 = por %p123, %p124
      %p126 = scmp.ne.s32.totalorder %s112, %s113
      %p127 = scmp.eq.s32.totalorder %s21, 1
      %p128 = por %p126, %p127
      %p130 = scmp.ne.s32.totalorder %s113, %s129
      %p131 = scmp.eq.s32.totalorder %s21, 0
      %p132 = por %p130, %p131
      %p133 = scmp.le.s32.totalorder 1, %s15
      %p134 = scmp.lt.s32.totalorder %s15, 3
      %p135 = pnand %p133, %p134
      %p136 = pneg %p135
      // Predicated region
      $region9: #{tpu_custom_call.1} parent=5 // pred_check
        _
      $region10: #{tpu_custom_call.1} parent=5 // pred_check_branch
        %138 = sbr.rel (%p135) target = $region12
      $region11: #{tpu_custom_call.1} parent=5 // pred_region
        %s139 = ssub.s32 %s15, 1
        // Predicated region
        $region13: #{tpu_custom_call.1} parent=11 // pred_check
          %p140 = pneg %p76
        $region14: #{tpu_custom_call.1} parent=11 // pred_check_branch
          %142 = sbr.rel (%p140) target = $region16
        $region15: #{tpu_custom_call.1} parent=11 // pred_region
          _
        $region16: #{tpu_custom_call.1} parent=11 // pred_fallthru
          _
        // Predicated region
        $region17: #{tpu_custom_call.1} parent=11 // pred_check
          %p143 = pneg %p97
        $region18: #{tpu_custom_call.1} parent=11 // pred_check_branch
          %145 = sbr.rel (%p143) target = $region20
        $region19: #{tpu_custom_call.1} parent=11 // pred_region
          _
        $region20: #{tpu_custom_call.1} parent=11 // pred_fallthru
          _
      $region12: #{tpu_custom_call.1} parent=5 // pred_fallthru
        _
      %p146 = scmp.lt.s32.totalorder %s15, 2
      // Predicated region
      $region21: #{tpu_custom_call.1} parent=5 // pred_check
        %p147 = pneg %p146
      $region22: #{tpu_custom_call.1} parent=5 // pred_check_branch
        %149 = sbr.rel (%p147) target = $region24
      $region23: #{tpu_custom_call.1} parent=5 // pred_region
        // Predicated region
        $region25: #{tpu_custom_call.1} parent=23 // pred_check
          %p150 = pneg %p49
        $region26: #{tpu_custom_call.1} parent=23 // pred_check_branch
          %152 = sbr.rel (%p150) target = $region28
        $region27: #{tpu_custom_call.1} parent=23 // pred_region
          %s153 = sand.u32 %s39, 1
          %s154 = scalar_lea.sflag [#allocation3], %s153
          %s155 = sand.u32 %s39, 1
          %s156 = smul.addr %s155, 16
          %s157 = scalar_lea.vmem [#allocation2], %s156
          %159 = vsyncadd %s154, 0
          %s160 = smul.addr %s22, 2
          %s161 = sadd.s32 %s23, %s160
          %s162 = smul.addr %s161, 8
          %s163 = scalar_lea.hbm %s0, %s162
          %s164 = sshll.u32 %s163, 4
          %s165 = int_to_ptr.hbm [resolvable:$true] %s164
          %s166 = sshll.u32 %s157, 4
          %s167 = int_to_ptr.vmem [resolvable:$true] %s166
          %172 = dma.hbm_to_vmem [thread:$0]  %s165, 256, %s167, %s154, 128, 128, 8
        $region28: #{tpu_custom_call.1} parent=23 // pred_fallthru
          _
      $region24: #{tpu_custom_call.1} parent=5 // pred_fallthru
        _
      %p173 = scmp.le.s32.totalorder 1, %s15
      %p174 = scmp.lt.s32.totalorder %s15, 3
      %p175 = pnand %p173, %p174
      %p176 = pneg %p175
      // Predicated region
      $region29: #{tpu_custom_call.1} parent=5 // pred_check
        _
      $region30: #{tpu_custom_call.1} parent=5 // pred_check_branch
        %178 = sbr.rel (%p175) target = $region32
      $region31: #{tpu_custom_call.1} parent=5 // pred_region
        %s179 = ssub.s32 %s15, 1
        %s180 = sand.u32 %s42, 1
        %s181 = scalar_lea.sflag [#allocation3], %s180
        %s182 = sand.u32 %s42, 1
        %s183 = smul.addr %s182, 16
        %s184 = scalar_lea.vmem [#allocation2], %s183
        // Predicated region
        $region33: #{tpu_custom_call.1} parent=31 // pred_check
          %p185 = pneg %p55
        $region34: #{tpu_custom_call.1} parent=31 // pred_check_branch
          %187 = sbr.rel (%p185) target = $region36
        $region35: #{tpu_custom_call.1} parent=31 // pred_region
          %189 = dma.done %s181, 256
        $region36: #{tpu_custom_call.1} parent=31 // pred_fallthru
          _
        %s190 = sand.u32 %s42, 1
        %s191 = scalar_lea.sflag [#allocation3], %s190
        %s192 = sand.u32 %s42, 1
        %s193 = smul.addr %s192, 16
        %s194 = scalar_lea.vmem [#allocation2], %s193
        %p195 = pneg %p55
        %p196 = pneg %p52
        %p197 = pneg %p76
        %p198 = pneg %p73
        %p199 = pneg %p97
        %p200 = pneg %p94
        %p201 = pneg %p125
        %p202 = pneg %p122
        %s203 = sand.u32 %s112, 1
        %s204 = scalar_lea.sflag [#allocation4], %s203
        %s205 = sand.u32 %s112, 1
        %s206 = smul.addr %s205, 8
        %s207 = scalar_lea.vmem [#allocation5], %s206
        %v208 = vld [vmem:[%s1] sm:$0xff]
        %v209 = vld [vmem:[%s184] sm:$0xff]
        %v210 = vld [vmem:[%s184 + $0x8] sm:$0xff]
        %v211 = vld [vmem:[%s2] sm:$0xff]
        %213 = vset.pattern.permute.xlu0 0
        %214 = vperm.xlu0 %213, %v211
        %v215 = vpop.permute.xlu0 %214
        %vm217 = vcmask 130048
        %v219 = vsel %vm217, %v208, 0
        %221 = vmatpush.msra.mxu0 0.0
        %222 = vmatpush.msra.mxu0 0.0
        %223 = vmatpush.msra.mxu0 0.0
        %224 = vmatpush.msra.mxu0 0.0
        %225 = vmatpush.msra.mxu0 0.0
        %226 = vmatpush.msra.mxu0 0.0
        %227 = vmatpush.msra.mxu0 0.0
        %228 = vmatpush.msra.mxu0 0.0
        %229 = vmatpush.msra.mxu0 0.0
        %230 = vmatpush.msra.mxu0 0.0
        %231 = vmatpush.msra.mxu0 0.0
        %232 = vmatpush.msra.mxu0 0.0
        %233 = vmatpush.msra.mxu0 0.0
        %234 = vmatpush.msra.mxu0 0.0
        %235 = vmatpush.msra.mxu0 %v210
        %236 = vmatpush.msra.mxu0 %v209
        %237 = vmatmul.f32.gmra.mxu0 %v219
        %v238 = vpop.f32.mrf.mxu0
        %v239 = vadd.f32 %v215, %v238
        %240 = vdwg.mxu0
        %v241 = vmul.f32 %v239, 0.5
        %v242 = vtanh.pop %v241
        %v243 = vadd.f32 %v242, 1.0
        %v244 = vmul.f32 %v243, 0.5
        %v245 = vmul.f32 %v239, %v244
        %vm246 = vcmask 523264
        %247 = vst.msk [vmem:[%s207] sm:$0xff] %vm246, %v245
        %s248 = sand.u32 %s112, 1
        %s249 = scalar_lea.sflag [#allocation4], %s248
        %s250 = sand.u32 %s112, 1
        %s251 = smul.addr %s250, 8
        %s252 = scalar_lea.vmem [#allocation5], %s251
        // Predicated region
        $region37: #{tpu_custom_call.1} parent=31 // pred_check
          %p253 = pneg %p122
        $region38: #{tpu_custom_call.1} parent=31 // pred_check_branch
          %255 = sbr.rel (%p253) target = $region40
        $region39: #{tpu_custom_call.1} parent=31 // pred_region
          %257 = vsyncadd %s249, 0
          %s258 = sadd.s32 %s25, %s24
          %s259 = smul.addr %s258, 8
          %s260 = scalar_lea.hbm %s3, %s259
          %s262 = sshll.u32 %s252, 4
          %s263 = int_to_ptr.vmem [resolvable:$true] %s262
          %s264 = sshll.u32 %s260, 4
          %s265 = int_to_ptr.hbm [resolvable:$true] %s264
          %267 = dma.vmem_to_hbm [thread:$0]  %s263, 128, %s265, %s249
        $region40: #{tpu_custom_call.1} parent=31 // pred_fallthru
          _
      $region32: #{tpu_custom_call.1} parent=5 // pred_fallthru
        _
      %p268 = scmp.le.s32.totalorder 2, %s15
      // Predicated region
      $region41: #{tpu_custom_call.1} parent=5 // pred_check
        %p269 = pneg %p268
      $region42: #{tpu_custom_call.1} parent=5 // pred_check_branch
        %271 = sbr.rel (%p269) target = $region44
      $region43: #{tpu_custom_call.1} parent=5 // pred_region
        %s272 = ssub.s32 %s15, 2
        // Predicated region
        $region45: #{tpu_custom_call.1} parent=43 // pred_check
          %p273 = pneg %p128
        $region46: #{tpu_custom_call.1} parent=43 // pred_check_branch
          %275 = sbr.rel (%p273) target = $region48
        $region47: #{tpu_custom_call.1} parent=43 // pred_region
          %s276 = sand.u32 %s113, 1
          %s277 = scalar_lea.sflag [#allocation4], %s276
          %s278 = sand.u32 %s113, 1
          %s279 = smul.addr %s278, 8
          %s280 = scalar_lea.vmem [#allocation5], %s279
          %282 = dma.done %s277, 128
        $region48: #{tpu_custom_call.1} parent=43 // pred_fallthru
          _
      $region44: #{tpu_custom_call.1} parent=5 // pred_fallthru
        _
    $region6: #{tpu_custom_call.1} parent=1 // loop_footer
      %s19 = sadd.s32 1, %s15
    $region7: #{tpu_custom_call.1} parent=1 // loop_footer_branch
      %14 = sbr.rel target = $region3
    $region8: #{tpu_custom_call.1} parent=1 // loop_exit
      _
    %283 = vsyncpa [#allocation3], 1
    %s284 = scalar_lea.sflag [#allocation3], 1
    %285 = vsyncpa %s284, 1
    %286 = vsyncpa [#allocation4], 1
    %s287 = scalar_lea.sflag [#allocation4], 1
    %288 = vsyncpa %s287, 1

</llo_original>
